<compile_context>
chip_gen: v5e
topology: v5e:2x2
jax: 0.10.0
libtpu: 0.0.40
codegen_flags: <defaults>
</compile_context>

<pallas_src>
import functools

import jax
import jax.numpy as jnp
from jax import lax
from jax.experimental import pallas as pl
from jax.experimental.pallas import tpu as pltpu


def _round_up(x: int, m: int) -> int:
    return (x + m - 1) // m * m


def _ceil_div(a: int, b: int) -> int:
    return -(-a // b)


def _linear_kernel(x_ref, w_ref, b_ref, o_ref):
    """One (tm, tn) output tile; K is the innermost grid axis.

    x_ref: [tm, tk]           input tile
    w_ref: [tn, tk]           weight tile in native nn.Linear layout
    b_ref: [1, tn]   float32  bias tile
    o_ref: [tm, tn]  float32  output tile (resident across K, accumulated into)
    """
    k = pl.program_id(2)

    partial = lax.dot_general(
        x_ref[...], w_ref[...],
        dimension_numbers=(((1,), (1,)), ((), ())),   # x @ W^T, no relayout
        preferred_element_type=jnp.float32,
    )

    @pl.when(k == 0)
    def _init():
        o_ref[...] = partial + b_ref[...]             # bias added exactly once

    @pl.when(k > 0)
    def _accum():
        o_ref[...] = o_ref[...] + partial


def _pad_cast(a, shape, dtype):
    """Zero-pad `a` to `shape` and cast to `dtype`; no-op when already matching."""
    if tuple(a.shape) == tuple(shape) and a.dtype == jnp.dtype(dtype):
        return a
    out = jnp.zeros(shape, dtype)
    return out.at[tuple(slice(0, s) for s in a.shape)].set(a.astype(dtype))


def _vmem_capacity_bytes() -> int:
    # Conservative default = v7x per-TensorCore VMEM; v5e/v6e report 128 MiB.
    try:
        cap = int(pltpu.get_tpu_info().vmem_capacity_bytes)
        if cap > 0:
            return cap
    except Exception:
        pass
    return 64 * 1024 * 1024


def _tile_bytes(tm, tn, tk, x_it, w_it):
    # Double-buffered x / W / bias tiles + (double-buffered) resident f32 out.
    return (2 * tm * tk * x_it
            + 2 * tn * tk * w_it
            + 2 * 8 * tn * 4            # (1, tn) bias pads to 8 sublanes
            + 2 * tm * tn * 4)


def _plan_tiles(B, Dout, Din, x_it, w_it, sublane, budget):
    """Pick (tm, tn, tk, M, N, K)."""
    N = _round_up(Dout, 128)
    K = _round_up(Din, 128)

    def balanced_tm(cap):
        # Balanced M tiles (avoids a mostly-padding trailing tile).
        n_tiles = max(1, _ceil_div(B, cap))
        return _round_up(_ceil_div(B, n_tiles), sublane)

    # ---- weight-resident fast path: whole W as a single block -------------
    tm = balanced_tm(512)
    if _tile_bytes(tm, N, K, x_it, w_it) <= budget:
        tn, tk = N, K
        M = _round_up(B, tm)
        # Keep v7x's second TensorCore busy if the grid collapses to one tile.
        if M // tm == 1 and B > sublane:
            tm2 = _round_up(_ceil_div(B, 2), sublane)
            if (_round_up(B, tm2) // tm2 >= 2
                    and _tile_bytes(tm2, N, K, x_it, w_it) <= budget):
                tm = tm2
                M = _round_up(B, tm)
        return tm, tn, tk, M, N, K

    # ---- general tiled (M, N, K) path --------------------------------------
    tm = balanced_tm(512)
    tn = min(512, N)
    tk = min(1024, K)
    while _tile_bytes(tm, tn, tk, x_it, w_it) > budget and tk > 128:
        tk = max(128, tk // 2)
    while _tile_bytes(tm, tn, tk, x_it, w_it) > budget and tn > 128:
        tn = max(128, tn // 2)
    while _tile_bytes(tm, tn, tk, x_it, w_it) > budget and tm > sublane:
        tm = max(sublane, _round_up(tm // 2, sublane))
    M = _round_up(B, tm)
    if (M // tm) * (N // tn) == 1:         # give both TCs work when feasible
        if N >= 256 and (N // 2) % 128 == 0:
            tn = N // 2
        elif B > sublane:
            tm2 = _round_up(_ceil_div(B, 2), sublane)
            if _round_up(B, tm2) // tm2 >= 2:
                tm = tm2
                M = _round_up(B, tm)
    return tm, tn, tk, M, N, K


@functools.partial(jax.jit, static_argnames=("compute_dtype",))
def lr_forward(x, weight, bias, *, compute_dtype=None):
    """Pallas equivalent of LR.forward (nn.Linear): x @ W^T + b.

    x:      [B, Din]     weight: [Dout, Din] (PyTorch layout)   bias: [Dout]
    compute_dtype: optional cast of the matmul operands only (e.g. bfloat16
    for the v6e/v7x MXU fast path); accumulate / bias / output stay float32.
    """
    B, Din = x.shape
    Dout, _ = weight.shape
    out_dtype = x.dtype

    cdt = jnp.dtype(compute_dtype) if compute_dtype is not None else jnp.dtype(x.dtype)
    wdt = jnp.dtype(compute_dtype) if compute_dtype is not None else jnp.dtype(weight.dtype)
    x_it, w_it = cdt.itemsize, wdt.itemsize
    sublane = max(8, 32 // min(x_it, w_it))   # 8 for f32, 16 for bf16 packing

    vmem_cap = _vmem_capacity_bytes()
    budget = vmem_cap // 2

    tm, tn, tk, M, N, K = _plan_tiles(B, Dout, Din, x_it, w_it, sublane, budget)

    # Single fused pad+cast pass per operand; no-ops when already aligned.
    x_p = _pad_cast(x, (M, K), cdt)
    w_p = _pad_cast(weight, (N, K), wdt)                      # native layout, no transpose
    b_p = _pad_cast(bias.astype(jnp.float32).reshape(1, Dout), (1, N), jnp.float32)

    grid = (M // tm, N // tn, K // tk)

    acct = _tile_bytes(tm, tn, tk, x_it, w_it)
    vmem_limit = int(min(max(int(acct * 1.25) + (2 << 20), 16 * 1024 * 1024),
                         int(vmem_cap * 0.85)))

    out_it = jnp.dtype(out_dtype).itemsize
    cost = pl.CostEstimate(
        flops=2 * B * Din * Dout,
        transcendentals=0,
        bytes_accessed=x_it * B * Din + w_it * Dout * Din + out_it * B * Dout + 4 * Dout,
    )

    out_p = pl.pallas_call(
        _linear_kernel,
        out_shape=jax.ShapeDtypeStruct((M, N), jnp.float32),
        grid_spec=pltpu.PrefetchScalarGridSpec(
            num_scalar_prefetch=0,
            grid=grid,
            in_specs=[
                pl.BlockSpec((tm, tk), lambda i, j, k: (i, k)),   # x tile
                pl.BlockSpec((tn, tk), lambda i, j, k: (j, k)),   # W tile (native [Dout, Din])
                pl.BlockSpec((1, tn), lambda i, j, k: (0, j)),    # bias tile
            ],
            out_specs=pl.BlockSpec((tm, tn), lambda i, j, k: (i, j)),
        ),
        compiler_params=pltpu.CompilerParams(
            dimension_semantics=("parallel", "parallel", "arbitrary"),
            vmem_limit_bytes=vmem_limit,
        ),
        cost_estimate=cost,
    )(x_p, w_p, b_p)

    out = out_p[:B, :Dout]
    if out.dtype != out_dtype:
        out = out.astype(out_dtype)
    return out


def init_linear_params(key, in_features, out_features):
    """Deterministic init mirroring nn.Linear's uniform(-1/sqrt(fan_in), 1/sqrt(fan_in))."""
    kw, kb = jax.random.split(key)
    bound = 1.0 / jnp.sqrt(jnp.float32(in_features))
    weight = jax.random.uniform(
        kw, (out_features, in_features), jnp.float32, minval=-bound, maxval=bound
    )
    bias = jax.random.uniform(
        kb, (out_features,), jnp.float32, minval=-bound, maxval=bound
    )
    return weight, bias


if __name__ == "__main__":
    key = jax.random.PRNGKey(0)
    k_x, k_p, k_x2, k_p2, k_x3, k_p3 = jax.random.split(key, 6)

    # --- Small case matching LR(input_size, output_size) ---------------------
    batch, input_size, output_size = 8, 4, 2
    x = jax.random.normal(k_x, (batch, input_size), jnp.float32)
    weight, bias = init_linear_params(k_p, input_size, output_size)

    out = jax.block_until_ready(lr_forward(x, weight, bias))
    ref = x @ weight.T + bias
    assert out.shape == (batch, output_size)
    assert jnp.allclose(out, ref, atol=1e-5, rtol=1e-5)

    # --- Aligned larger case: weight-resident path + megacore M split --------
    B2, Din2, Dout2 = 128, 1024, 384
    x2 = jax.random.normal(k_x2, (B2, Din2), jnp.float32)
    w2, b2 = init_linear_params(k_p2, Din2, Dout2)

    out2 = jax.block_until_ready(lr_forward(x2, w2, b2))
    ref2 = x2 @ w2.T + b2
    assert out2.shape == (B2, Dout2)
    assert jnp.allclose(out2, ref2, atol=1e-2, rtol=1e-3)

    # --- Unaligned case: exercises the fused pad/cast path -------------------
    B3, Din3, Dout3 = 17, 300, 130
    x3 = jax.random.normal(k_x3, (B3, Din3), jnp.float32)
    w3, b3 = init_linear_params(k_p3, Din3, Dout3)

    out3 = jax.block_until_ready(lr_forward(x3, w3, b3))
    ref3 = x3 @ w3.T + b3
    assert out3.shape == (B3, Dout3)
    assert jnp.allclose(out3, ref3, atol=1e-3, rtol=1e-3)

    print("KERNEL_OK")
</pallas_src>

<mosaic_0001>
module attributes {stable_mosaic.version = 11 : i64} {
  func.func @_linear_kernel(%arg0: i32, %arg1: i32, %arg2: i32, %arg3: memref<8x128xf32, #tpu.memory_space<vmem>>, %arg4: memref<128x128xf32, #tpu.memory_space<vmem>>, %arg5: memref<1x128xf32, #tpu.memory_space<vmem>>, %arg6: memref<8x128xf32, #tpu.memory_space<vmem>>) attributes {dimension_semantics = [#tpu.dimension_semantics<parallel>, #tpu.dimension_semantics<parallel>, #tpu.dimension_semantics<arbitrary>], iteration_bounds = array<i64: 1, 1, 1>, scalar_prefetch = 0 : i64, scratch_operands = 0 : i64, tpu.core_type = #tpu.core_type<tc>, window_params = [{transform_indices = @transform_0, window_bounds = array<i64: 8, 128>}, {transform_indices = @transform_1, window_bounds = array<i64: 128, 128>}, {transform_indices = @transform_2, window_bounds = array<i64: 1, 128>}, {transform_indices = @transform_3, window_bounds = array<i64: 8, 128>}]} {
    %c0 = arith.constant 0 : index
    %c0_0 = arith.constant 0 : index
    %0 = vector.load %arg3[%c0, %c0_0] : memref<8x128xf32, #tpu.memory_space<vmem>>, vector<8x128xf32>
    %c0_1 = arith.constant 0 : index
    %c0_2 = arith.constant 0 : index
    %1 = vector.load %arg4[%c0_1, %c0_2] : memref<128x128xf32, #tpu.memory_space<vmem>>, vector<128x128xf32>
    %cst = arith.constant dense<0.000000e+00> : vector<8x128xf32>
    %2 = tpu.matmul %0, %1, %cst {dimension_numbers = #tpu.dot_dimension_numbers<[1], [1], [0], [0], [0, 0, 1, 0], [], []>} : vector<8x128xf32>, vector<128x128xf32>, vector<8x128xf32> -> vector<8x128xf32>
    %c0_i32 = arith.constant 0 : i32
    %3 = arith.cmpi eq, %arg2, %c0_i32 : i32
    %4 = arith.extui %3 : i1 to i32
    %c0_i32_3 = arith.constant 0 : i32
    %5 = arith.cmpi ne, %4, %c0_i32_3 : i32
    scf.if %5 {
      %c0_6 = arith.constant 0 : index
      %c0_7 = arith.constant 0 : index
      %9 = vector.load %arg5[%c0_6, %c0_7] : memref<1x128xf32, #tpu.memory_space<vmem>>, vector<1x128xf32>
      %10 = vector.broadcast %9 : vector<1x128xf32> to vector<8x128xf32>
      %11 = arith.addf %2, %10 : vector<8x128xf32>
      %c0_8 = arith.constant 0 : index
      %c0_9 = arith.constant 0 : index
      %12 = vector.load %arg6[%c0_8, %c0_9] : memref<8x128xf32, #tpu.memory_space<vmem>>, vector<8x128xf32>
      tpu.vector_store %arg6[%c0_8, %c0_9], %11 {strides = array<i32>} : memref<8x128xf32, #tpu.memory_space<vmem>>, vector<8x128xf32>,
    } else {
    }
    %c0_i32_4 = arith.constant 0 : i32
    %6 = arith.cmpi sgt, %arg2, %c0_i32_4 : i32
    %7 = arith.extui %6 : i1 to i32
    %c0_i32_5 = arith.constant 0 : i32
    %8 = arith.cmpi ne, %7, %c0_i32_5 : i32
    scf.if %8 {
      %c0_6 = arith.constant 0 : index
      %c0_7 = arith.constant 0 : index
      %9 = vector.load %arg6[%c0_6, %c0_7] : memref<8x128xf32, #tpu.memory_space<vmem>>, vector<8x128xf32>
      %10 = arith.addf %9, %2 : vector<8x128xf32>
      %c0_8 = arith.constant 0 : index
      %c0_9 = arith.constant 0 : index
      %11 = vector.load %arg6[%c0_8, %c0_9] : memref<8x128xf32, #tpu.memory_space<vmem>>, vector<8x128xf32>
      tpu.vector_store %arg6[%c0_8, %c0_9], %10 {strides = array<i32>} : memref<8x128xf32, #tpu.memory_space<vmem>>, vector<8x128xf32>,
    } else {
    }
    return
  }
  func.func @transform_0(%arg0: i32, %arg1: i32, %arg2: i32) -> (i32, i32) {
    %c0_i32 = arith.constant 0 : i32
    return %arg0, %arg2 : i32, i32
  }
  func.func @transform_1(%arg0: i32, %arg1: i32, %arg2: i32) -> (i32, i32) {
    %c0_i32 = arith.constant 0 : i32
    return %arg1, %arg2 : i32, i32
  }
  func.func @transform_2(%arg0: i32, %arg1: i32, %arg2: i32) -> (i32, i32) {
    %c0_i32 = arith.constant 0 : i32
    %c0_i32_0 = arith.constant 0 : i32
    return %c0_i32, %arg1 : i32, i32
  }
  func.func @transform_3(%arg0: i32, %arg1: i32, %arg2: i32) -> (i32, i32) {
    %c0_i32 = arith.constant 0 : i32
    return %arg0, %arg1 : i32, i32
  }
}

</mosaic_0001>

<llo_original>
// kernel: lr_forward.1
$region0: #{lr_forward.1}
  #allocation0 [shape = 'u32[]', space=smem, size = 0x4, offset = 0x4, fixed_abs, tag = 'smem constant byte address 0x4 - core index']
  #allocation1 [shape = 'u32[72,128]{1,0:T(1,128)}', space=vmem, size = 0x9000, scoped, tag = 'internal scratch']
  %s0 = inlined_call_operand.vmem [shape: f32[8,128], index: 0, kind: input, shape index: {}]
  %s1 = inlined_call_operand.vmem [shape: f32[128,128], index: 1, kind: input, shape index: {}]
  %s2 = inlined_call_operand.vmem [shape: f32[1,128], index: 2, kind: input, shape index: {}]
  %s3 = inlined_call_operand.vmem [shape: f32[8,128], index: 3, kind: output, shape index: {}]
  %s4 = sld [smem:[#allocation0]]
  $region30: #{lr_forward.1} parent=0
    _
  %s6 = ssub.s32 1, %s4
  %s7 = scalar_select 0, %s6, %s4
  // Predicated region
  $region2: #{lr_forward.1} parent=0 // pred_check
    _
  $region3: #{lr_forward.1} parent=0 // pred_check_branch
    %9 = sbr.rel (0) target = $region5
  $region4: #{lr_forward.1} parent=0 // pred_region
    _
  $region5: #{lr_forward.1} parent=0 // pred_fallthru
    _
  // Predicated region
  $region6: #{lr_forward.1} parent=0 // pred_check
    _
  $region7: #{lr_forward.1} parent=0 // pred_check_branch
    %11 = sbr.rel (0) target = $region9
  $region8: #{lr_forward.1} parent=0 // pred_region
    _
  $region9: #{lr_forward.1} parent=0 // pred_fallthru
    _
  // Predicated region
  $region10: #{lr_forward.1} parent=0 // pred_check
    _
  $region11: #{lr_forward.1} parent=0 // pred_check_branch
    %13 = sbr.rel (0) target = $region13
  $region12: #{lr_forward.1} parent=0 // pred_region
    _
  $region13: #{lr_forward.1} parent=0 // pred_fallthru
    _
  %v14 = vld [vmem:[%s0] sm:$0xff]
  %v15 = vld [vmem:[%s1] sm:$0xff]
  %v16 = vld [vmem:[%s1 + $0x8] sm:$0xff]
  %v17 = vld [vmem:[%s1 + $0x10] sm:$0xff]
  %v18 = vld [vmem:[%s1 + $0x18] sm:$0xff]
  %v19 = vld [vmem:[%s1 + $0x20] sm:$0xff]
  %v20 = vld [vmem:[%s1 + $0x28] sm:$0xff]
  %v21 = vld [vmem:[%s1 + $0x30] sm:$0xff]
  %v22 = vld [vmem:[%s1 + $0x38] sm:$0xff]
  %v23 = vld [vmem:[%s1 + $0x40] sm:$0xff]
  %v24 = vld [vmem:[%s1 + $0x48] sm:$0xff]
  %v25 = vld [vmem:[%s1 + $0x50] sm:$0xff]
  %v26 = vld [vmem:[%s1 + $0x58] sm:$0xff]
  %v27 = vld [vmem:[%s1 + $0x60] sm:$0xff]
  %v28 = vld [vmem:[%s1 + $0x68] sm:$0xff]
  %v29 = vld [vmem:[%s1 + $0x70] sm:$0xff]
  %v30 = vld [vmem:[%s1 + $0x78] sm:$0xff]
  %31 = vmatpush.xpose.msra.mxu0 %v30
  %32 = vmatpush.xpose.msra.mxu0 %v29
  %33 = vmatpush.xpose.msra.mxu0 %v28
  %34 = vmatpush.xpose.msra.mxu0 %v27
  %35 = vmatpush.xpose.msra.mxu0 %v26
  %36 = vmatpush.xpose.msra.mxu0 %v25
  %37 = vmatpush.xpose.msra.mxu0 %v24
  %38 = vmatpush.xpose.msra.mxu0 %v23
  %39 = vmatpush.xpose.msra.mxu0 %v22
  %40 = vmatpush.xpose.msra.mxu0 %v21
  %41 = vmatpush.xpose.msra.mxu0 %v20
  %42 = vmatpush.xpose.msra.mxu0 %v19
  %43 = vmatpush.xpose.msra.mxu0 %v18
  %44 = vmatpush.xpose.msra.mxu0 %v17
  %45 = vmatpush.xpose.msra.mxu0 %v16
  %46 = vmatpush.xpose.msra.mxu0 %v15
  %47 = vmatmul.f32.gmra.mxu0 %v14
  %v48 = vpop.f32.mrf.mxu0
  %v49 = vadd.f32 0.0, %v48
  %50 = vdwg.mxu0
  %p51 = scmp.eq.s32.totalorder 0, 0
  // Predicated region
  $region14: #{lr_forward.1} parent=0 // pred_check
    %p52 = pneg %p51
  $region15: #{lr_forward.1} parent=0 // pred_check_branch
    %54 = sbr.rel (%p52) target = $region17
  $region16: #{lr_forward.1} parent=0 // pred_region
    %v55 = vld [vmem:[%s2] sm:$0x1]
    %v57 = vperm.slane %v55, 0
    %v59 = vadd.f32 %v49, %v57
    %60 = vst [vmem:[%s3] sm:$0xff] %v59
  $region17: #{lr_forward.1} parent=0 // pred_fallthru
    _
  %p61 = scmp.gt.s32.totalorder 0, 0
  // Predicated region
  $region18: #{lr_forward.1} parent=0 // pred_check
    %p62 = pneg %p61
  $region19: #{lr_forward.1} parent=0 // pred_check_branch
    %64 = sbr.rel (%p62) target = $region21
  $region20: #{lr_forward.1} parent=0 // pred_region
    %v65 = vld [vmem:[%s3] sm:$0xff]
    %v66 = vadd.f32 %v65, %v49
    %67 = vst [vmem:[%s3] sm:$0xff] %v66
  $region21: #{lr_forward.1} parent=0 // pred_fallthru
    _
  // Predicated region
  $region22: #{lr_forward.1} parent=0 // pred_check
    _
  $region23: #{lr_forward.1} parent=0 // pred_check_branch
    %69 = sbr.rel (0) target = $region25
  $region24: #{lr_forward.1} parent=0 // pred_region
    _
  $region25: #{lr_forward.1} parent=0 // pred_fallthru
    _
  // Predicated region
  $region26: #{lr_forward.1} parent=0 // pred_check
    _
  $region27: #{lr_forward.1} parent=0 // pred_check_branch
    %71 = sbr.rel (0) target = $region29
  $region28: #{lr_forward.1} parent=0 // pred_region
    _
  $region29: #{lr_forward.1} parent=0 // pred_fallthru
    _

</llo_original>
